<compile_context>
chip_gen: v7x
topology: tpu7x:2x2x1
jax: 0.10.0
libtpu: 0.0.40
codegen_flags: <defaults>
</compile_context>

<pallas_src>
import functools

import jax
import jax.numpy as jnp
from jax.experimental import pallas as pl
from jax.experimental.pallas import tpu as pltpu

LEAKY_SLOPE = 0.01  # F.leaky_relu default negative_slope


def crl_kernel(has_first, n_mid, x_ref, *refs):
    """Fused CRL forward for one batch tile.

    refs (in order):
      [w0, b0]        if has_first   -- first encoder layer (gets leaky_relu)
      [mid_w, mid_b]  if n_mid > 0   -- stacked middle encoder layers
      w_last, b_last                 -- folded (last encoder @ transitions @ theta) layer
      out_ref
    """
    idx = 0
    if has_first:
        w0_ref, b0_ref = refs[idx], refs[idx + 1]
        idx += 2
    if n_mid > 0:
        mid_w_ref, mid_b_ref = refs[idx], refs[idx + 1]
        idx += 2
    wl_ref, bl_ref, o_ref = refs[idx], refs[idx + 1], refs[idx + 2]

    x = x_ref[...]
    if x.ndim == 3:              # X block is (TB, T, F): use timestep 0 only
        x = x[:, 0, :]
    z = x.astype(jnp.float32)

    if has_first:
        z = jnp.dot(z, w0_ref[...], preferred_element_type=jnp.float32) + b0_ref[...]
        z = jnp.where(z > 0, z, LEAKY_SLOPE * z)

    # statically unrolled loop over the stacked middle encoder layers
    for i in range(n_mid):
        z = jnp.dot(z, mid_w_ref[i], preferred_element_type=jnp.float32) + mid_b_ref[i]
        z = jnp.where(z > 0, z, LEAKY_SLOPE * z)

    # folded last-encoder-layer + transition chain + final theta (one matmul)
    y = jnp.dot(z, wl_ref[...], preferred_element_type=jnp.float32) + bl_ref[...]
    o_ref[...] = y.astype(o_ref.dtype)


def fold_crl_params(params):
    """Precompute the folded / stacked parameter set used by the kernel."""
    enc_ws, enc_bs, trans_ws, theta_last = params

    # bias-free tail:  z @ T0 @ T1 ... @ theta_last  ==  z @ W_fold
    w_fold = theta_last.astype(jnp.float32)
    for w in reversed(trans_ws):
        w_fold = jnp.dot(w.astype(jnp.float32), w_fold)

    # no activation after the last encoder layer -> fold it in as well
    w_last = jnp.dot(enc_ws[-1].astype(jnp.float32), w_fold)   # (in_last, out)
    b_last = jnp.dot(enc_bs[-1].astype(jnp.float32), w_fold)   # (1, out)

    hidden_ws = [w.astype(jnp.float32) for w in enc_ws[:-1]]
    hidden_bs = [b.astype(jnp.float32) for b in enc_bs[:-1]]
    if hidden_ws:
        w0, b0 = hidden_ws[0], hidden_bs[0]
        mids_w, mids_b = hidden_ws[1:], hidden_bs[1:]
    else:
        w0 = b0 = None
        mids_w, mids_b = [], []

    mid_w = jnp.stack(mids_w) if mids_w else None   # (n_mid, W, W)
    mid_b = jnp.stack(mids_b) if mids_b else None   # (n_mid, 1, W)
    return dict(w0=w0, b0=b0, mid_w=mid_w, mid_b=mid_b,
                w_last=w_last, b_last=b_last)


def crl_forward(X, folded):
    """X: (B, F) or (B, T, F). Runs the whole fused forward in one pallas_call."""
    w0, b0 = folded["w0"], folded["b0"]
    mid_w, mid_b = folded["mid_w"], folded["mid_b"]
    w_last, b_last = folded["w_last"], folded["b_last"]

    has_first = w0 is not None
    n_mid = 0 if mid_w is None else mid_w.shape[0]
    out_features = w_last.shape[1]

    B = X.shape[0]
    TB = B if B <= 512 else 512                # batch tile (rows per grid step)
    grid = (pl.cdiv(B, TB),)

    if X.ndim > 2:
        nd = X.ndim
        x_spec = pl.BlockSpec((TB,) + X.shape[1:],
                              lambda i, _nd=nd: (i,) + (0,) * (_nd - 1))
    else:
        x_spec = pl.BlockSpec((TB, X.shape[1]), lambda i: (i, 0))

    def full_spec(arr):
        # constant-index full-array block -> fetched once, stays VMEM-resident
        return pl.BlockSpec(arr.shape, lambda i, _nd=arr.ndim: (0,) * _nd)

    inputs = [X]
    in_specs = [x_spec]
    if has_first:
        inputs += [w0, b0]
        in_specs += [full_spec(w0), full_spec(b0)]
    if n_mid > 0:
        inputs += [mid_w, mid_b]
        in_specs += [full_spec(mid_w), full_spec(mid_b)]
    inputs += [w_last, b_last]
    in_specs += [full_spec(w_last), full_spec(b_last)]

    kernel = functools.partial(crl_kernel, has_first, n_mid)
    return pl.pallas_call(
        kernel,
        grid=grid,
        out_shape=jax.ShapeDtypeStruct((B, out_features), jnp.float32),
        in_specs=in_specs,
        out_specs=pl.BlockSpec((TB, out_features), lambda i: (i, 0)),
        compiler_params=pltpu.CompilerParams(
            dimension_semantics=("parallel",)),   # shards batch tiles across TCs (v7x)
    )(*inputs)


def init_crl_params(key, input_features, latent_size, output_features,
                    mlp_layers, pi_steps):
    """Deterministic init mimicking PyTorch nn.Linear defaults
    (uniform(-1/sqrt(fan_in), 1/sqrt(fan_in))). Weights stored (in, out)."""
    width = input_features if latent_size is None else latent_size
    neurons = [input_features, width] + [width] * mlp_layers  # encoder sizes

    def uni(k, shape, fan_in):
        bound = 1.0 / (fan_in ** 0.5)
        return jax.random.uniform(k, shape, jnp.float32, -bound, bound)

    keys = iter(jax.random.split(key, 2 * (len(neurons) - 1) + pi_steps + 1))

    enc_ws, enc_bs = [], []
    for i in range(len(neurons) - 1):
        fi, fo = neurons[i], neurons[i + 1]
        enc_ws.append(uni(next(keys), (fi, fo), fi))
        enc_bs.append(uni(next(keys), (1, fo), fi))

    trans_ws = [uni(next(keys), (width, width), width) for _ in range(pi_steps)]
    theta_last = uni(next(keys), (width, output_features), width)
    return enc_ws, enc_bs, trans_ws, theta_last


def crl_forward_ref(X, params):
    """Pure-JAX reference of the ORIGINAL (unfolded) math, for correctness."""
    enc_ws, enc_bs, trans_ws, theta_last = params
    x = X[:, 0] if X.ndim > 2 else X
    z = x.astype(jnp.float32)
    for i, (w, b) in enumerate(zip(enc_ws, enc_bs)):
        z = z @ w + b
        if i < len(enc_ws) - 1:
            z = jnp.where(z > 0, z, LEAKY_SLOPE * z)
    for w in trans_ws:
        z = z @ w
    return z @ theta_last


if __name__ == "__main__":
    # small shapes consistent with the module's constructor
    batch = 8
    input_features = 32
    latent_size = 32
    output_features = 8
    mlp_layers = 2
    pi_steps = 3

    key = jax.random.PRNGKey(0)
    k_params, k_x = jax.random.split(key)
    params = init_crl_params(k_params, input_features, latent_size,
                             output_features, mlp_layers, pi_steps)

    # training-data layout: X is (batch, pi_steps+1, input_features); the
    # forward pass uses only timestep 0 (selected inside the kernel).
    X = jax.random.normal(k_x, (batch, pi_steps + 1, input_features),
                          dtype=jnp.float32)

    folded = fold_crl_params(params)           # one-time algebraic fold
    y_hat = crl_forward(X, folded)
    y_hat = jax.block_until_ready(y_hat)

    y_ref = jax.block_until_ready(crl_forward_ref(X, params))
    assert y_hat.shape == (batch, output_features)
    assert jnp.allclose(y_hat, y_ref, atol=1e-4, rtol=1e-4)

    print("KERNEL_OK")
</pallas_src>

<mosaic_0001>
module attributes {stable_mosaic.version = 11 : i64} {
  func.func @crl_kernel(%arg0: i32, %arg1: memref<8x4x32xf32, #tpu.memory_space<vmem>>, %arg2: memref<32x32xf32, #tpu.memory_space<vmem>>, %arg3: memref<1x32xf32, #tpu.memory_space<vmem>>, %arg4: memref<1x32x32xf32, #tpu.memory_space<vmem>>, %arg5: memref<1x1x32xf32, #tpu.memory_space<vmem>>, %arg6: memref<32x8xf32, #tpu.memory_space<vmem>>, %arg7: memref<1x8xf32, #tpu.memory_space<vmem>>, %arg8: memref<8x8xf32, #tpu.memory_space<vmem>>) attributes {dimension_semantics = [#tpu.dimension_semantics<parallel>], iteration_bounds = array<i64: 1>, scalar_prefetch = 0 : i64, scratch_operands = 0 : i64, tpu.core_type = #tpu.core_type<tc>, window_params = [{transform_indices = @transform_0, window_bounds = array<i64: 8, 4, 32>}, {pipeline_mode = #tpu.pipeline_mode<synchronous>, transform_indices = @transform_1, window_bounds = array<i64: 32, 32>}, {pipeline_mode = #tpu.pipeline_mode<synchronous>, transform_indices = @transform_2, window_bounds = array<i64: 1, 32>}, {pipeline_mode = #tpu.pipeline_mode<synchronous>, transform_indices = @transform_3, window_bounds = array<i64: 1, 32, 32>}, {pipeline_mode = #tpu.pipeline_mode<synchronous>, transform_indices = @transform_4, window_bounds = array<i64: 1, 1, 32>}, {pipeline_mode = #tpu.pipeline_mode<synchronous>, transform_indices = @transform_5, window_bounds = array<i64: 32, 8>}, {pipeline_mode = #tpu.pipeline_mode<synchronous>, transform_indices = @transform_6, window_bounds = array<i64: 1, 8>}, {transform_indices = @transform_7, window_bounds = array<i64: 8, 8>}]} {
    %c0 = arith.constant 0 : index
    %c0_0 = arith.constant 0 : index
    %c0_1 = arith.constant 0 : index
    %0 = vector.load %arg1[%c0, %c0_0, %c0_1] : memref<8x4x32xf32, #tpu.memory_space<vmem>>, vector<8x4x32xf32>
    %1 = vector.extract_strided_slice %0 {offsets = [0, 0, 0], sizes = [8, 1, 32], strides = [1, 1, 1]} : vector<8x4x32xf32> to vector<8x1x32xf32>
    %2 = vector.shape_cast %1 : vector<8x1x32xf32> to vector<8x32xf32>
    %c0_2 = arith.constant 0 : index
    %c0_3 = arith.constant 0 : index
    %3 = vector.load %arg2[%c0_2, %c0_3] : memref<32x32xf32, #tpu.memory_space<vmem>>, vector<32x32xf32>
    %cst = arith.constant dense<0.000000e+00> : vector<8x32xf32>
    %4 = tpu.matmul %2, %3, %cst {dimension_numbers = #tpu.dot_dimension_numbers<[1], [0], [0], [1], [0, 0, 1, 1], [], []>} : vector<8x32xf32>, vector<32x32xf32>, vector<8x32xf32> -> vector<8x32xf32>
    %c0_4 = arith.constant 0 : index
    %c0_5 = arith.constant 0 : index
    %5 = vector.load %arg3[%c0_4, %c0_5] : memref<1x32xf32, #tpu.memory_space<vmem>>, vector<1x32xf32>
    %6 = vector.broadcast %5 : vector<1x32xf32> to vector<8x32xf32>
    %7 = arith.addf %4, %6 : vector<8x32xf32>
    %cst_6 = arith.constant 0.000000e+00 : f32
    %8 = vector.broadcast %cst_6 : f32 to vector<8x32xf32>
    %9 = arith.cmpf ogt, %7, %8 : vector<8x32xf32>
    %cst_7 = arith.constant 0.00999999977 : f32
    %10 = vector.broadcast %cst_7 : f32 to vector<8x32xf32>
    %11 = arith.mulf %10, %7 : vector<8x32xf32>
    %12 = arith.select %9, %7, %11 : vector<8x32xi1>, vector<8x32xf32>
    %c0_8 = arith.constant 0 : index
    %c0_9 = arith.constant 0 : index
    %c0_10 = arith.constant 0 : index
    %13 = vector.load %arg4[%c0_8, %c0_9, %c0_10] : memref<1x32x32xf32, #tpu.memory_space<vmem>>, vector<1x32x32xf32>
    %14 = vector.shape_cast %13 : vector<1x32x32xf32> to vector<32x32xf32>
    %cst_11 = arith.constant dense<0.000000e+00> : vector<8x32xf32>
    %15 = tpu.matmul %12, %14, %cst_11 {dimension_numbers = #tpu.dot_dimension_numbers<[1], [0], [0], [1], [0, 0, 1, 1], [], []>} : vector<8x32xf32>, vector<32x32xf32>, vector<8x32xf32> -> vector<8x32xf32>
    %c0_12 = arith.constant 0 : index
    %c0_13 = arith.constant 0 : index
    %c0_14 = arith.constant 0 : index
    %16 = vector.load %arg5[%c0_12, %c0_13, %c0_14] : memref<1x1x32xf32, #tpu.memory_space<vmem>>, vector<1x1x32xf32>
    %17 = vector.shape_cast %16 : vector<1x1x32xf32> to vector<1x32xf32>
    %18 = vector.broadcast %17 : vector<1x32xf32> to vector<8x32xf32>
    %19 = arith.addf %15, %18 : vector<8x32xf32>
    %cst_15 = arith.constant 0.000000e+00 : f32
    %20 = vector.broadcast %cst_15 : f32 to vector<8x32xf32>
    %21 = arith.cmpf ogt, %19, %20 : vector<8x32xf32>
    %cst_16 = arith.constant 0.00999999977 : f32
    %22 = vector.broadcast %cst_16 : f32 to vector<8x32xf32>
    %23 = arith.mulf %22, %19 : vector<8x32xf32>
    %24 = arith.select %21, %19, %23 : vector<8x32xi1>, vector<8x32xf32>
    %c0_17 = arith.constant 0 : index
    %c0_18 = arith.constant 0 : index
    %25 = vector.load %arg6[%c0_17, %c0_18] : memref<32x8xf32, #tpu.memory_space<vmem>>, vector<32x8xf32>
    %cst_19 = arith.constant dense<0.000000e+00> : vector<8x8xf32>
    %26 = tpu.matmul %24, %25, %cst_19 {dimension_numbers = #tpu.dot_dimension_numbers<[1], [0], [0], [1], [0, 0, 1, 1], [], []>} : vector<8x32xf32>, vector<32x8xf32>, vector<8x8xf32> -> vector<8x8xf32>
    %c0_20 = arith.constant 0 : index
    %c0_21 = arith.constant 0 : index
    %27 = vector.load %arg7[%c0_20, %c0_21] : memref<1x8xf32, #tpu.memory_space<vmem>>, vector<1x8xf32>
    %28 = vector.broadcast %27 : vector<1x8xf32> to vector<8x8xf32>
    %29 = arith.addf %26, %28 : vector<8x8xf32>
    %c0_22 = arith.constant 0 : index
    %c0_23 = arith.constant 0 : index
    %30 = vector.load %arg8[%c0_22, %c0_23] : memref<8x8xf32, #tpu.memory_space<vmem>>, vector<8x8xf32>
    tpu.vector_store %arg8[%c0_22, %c0_23], %29 {strides = array<i32>} : memref<8x8xf32, #tpu.memory_space<vmem>>, vector<8x8xf32>,
    return
  }
  func.func @transform_0(%arg0: i32) -> (i32, i32, i32) {
    %c0_i32 = arith.constant 0 : i32
    %c0_i32_0 = arith.constant 0 : i32
    %c0_i32_1 = arith.constant 0 : i32
    return %arg0, %c0_i32, %c0_i32_0 : i32, i32, i32
  }
  func.func @transform_1(%arg0: i32) -> (i32, i32) {
    %c0_i32 = arith.constant 0 : i32
    %c0_i32_0 = arith.constant 0 : i32
    %c0_i32_1 = arith.constant 0 : i32
    return %c0_i32, %c0_i32_0 : i32, i32
  }
  func.func @transform_2(%arg0: i32) -> (i32, i32) {
    %c0_i32 = arith.constant 0 : i32
    %c0_i32_0 = arith.constant 0 : i32
    %c0_i32_1 = arith.constant 0 : i32
    return %c0_i32, %c0_i32_0 : i32, i32
  }
  func.func @transform_3(%arg0: i32) -> (i32, i32, i32) {
    %c0_i32 = arith.constant 0 : i32
    %c0_i32_0 = arith.constant 0 : i32
    %c0_i32_1 = arith.constant 0 : i32
    %c0_i32_2 = arith.constant 0 : i32
    return %c0_i32, %c0_i32_0, %c0_i32_1 : i32, i32, i32
  }
  func.func @transform_4(%arg0: i32) -> (i32, i32, i32) {
    %c0_i32 = arith.constant 0 : i32
    %c0_i32_0 = arith.constant 0 : i32
    %c0_i32_1 = arith.constant 0 : i32
    %c0_i32_2 = arith.constant 0 : i32
    return %c0_i32, %c0_i32_0, %c0_i32_1 : i32, i32, i32
  }
  func.func @transform_5(%arg0: i32) -> (i32, i32) {
    %c0_i32 = arith.constant 0 : i32
    %c0_i32_0 = arith.constant 0 : i32
    %c0_i32_1 = arith.constant 0 : i32
    return %c0_i32, %c0_i32_0 : i32, i32
  }
  func.func @transform_6(%arg0: i32) -> (i32, i32) {
    %c0_i32 = arith.constant 0 : i32
    %c0_i32_0 = arith.constant 0 : i32
    %c0_i32_1 = arith.constant 0 : i32
    return %c0_i32, %c0_i32_0 : i32, i32
  }
  func.func @transform_7(%arg0: i32) -> (i32, i32) {
    %c0_i32 = arith.constant 0 : i32
    %c0_i32_0 = arith.constant 0 : i32
    return %arg0, %c0_i32 : i32, i32
  }
}

</mosaic_0001>

<llo_original>
// kernel: tpu_custom_call.1
$region0: #{tpu_custom_call.1}
  #allocation0 [shape = 'u32[]', space=smem, size = 0x4, offset = 0x4, fixed_abs, tag = 'smem constant byte address 0x4 - core index']
  #allocation1 [shape = 'u32[144,128]{1,0:T(1,128)}', space=vmem, size = 0x12000, scoped, tag = 'internal scratch']
  %s0 = inlined_call_operand.vmem [shape: f32[8,4,32], index: 0, kind: input, shape index: {}]
  %s1 = inlined_call_operand.hbm [shape: f32[32,32], index: 1, kind: input, shape index: {}]
  %s2 = inlined_call_operand.vmem [shape: f32[1,32], index: 2, kind: input, shape index: {}]
  %s3 = inlined_call_operand.hbm [shape: f32[1,32,32], index: 3, kind: input, shape index: {}]
  %s4 = inlined_call_operand.vmem [shape: f32[1,1,32], index: 4, kind: input, shape index: {}]
  %s5 = inlined_call_operand.vmem [shape: f32[32,8], index: 5, kind: input, shape index: {}]
  %s6 = inlined_call_operand.vmem [shape: f32[1,8], index: 6, kind: input, shape index: {}]
  %s7 = inlined_call_operand.hbm [shape: f32[8,8], index: 7, kind: output, shape index: {}]
  %s8 = sld [smem:[#allocation0]]
  $region46: #{tpu_custom_call.1} parent=0
    _
  %s10 = ssub.s32 1, %s8
  %s11 = scalar_select 0, %s10, %s8
  $region1: #{tpu_custom_call.1} parent=0
    #allocation2 [shape = 'u8[16384]{0}', space=vmem, size = 0x4000, scoped, tag = 'input window, operand 1, single buffered']
    #allocation3 [shape = 's32[1]{0}', space=sflag, size = 0x4, scoped, tag = 'scoped memory for tpu_custom_call.1']
    #allocation4 [shape = 's32[1]{0}', space=sflag, size = 0x4, scoped, tag = 'scoped memory for tpu_custom_call.1']
    #allocation5 [shape = 'u8[16384]{0}', space=vmem, size = 0x4000, scoped, tag = 'input window, operand 3, single buffered']
    #allocation6 [shape = 's32[1]{0}', space=sflag, size = 0x4, scoped, tag = 'scoped memory for tpu_custom_call.1']
    #allocation7 [shape = 'u8[4096]{0}', space=vmem, size = 0x1000, scoped, tag = 'output window, operand 0, single buffered']
    %12 = vsyncpa [#allocation3], 0
    %13 = vsyncpa [#allocation6], 0
    %14 = vsyncpa [#allocation4], 0
    // Predicated region
    $region2: #{tpu_custom_call.1} parent=1 // pred_check
      _
    $region3: #{tpu_custom_call.1} parent=1 // pred_check_branch
      %16 = sbr.rel (0) target = $region5
    $region4: #{tpu_custom_call.1} parent=1 // pred_region
      _
    $region5: #{tpu_custom_call.1} parent=1 // pred_fallthru
      _
    // Predicated region
    $region6: #{tpu_custom_call.1} parent=1 // pred_check
      _
    $region7: #{tpu_custom_call.1} parent=1 // pred_check_branch
      %18 = sbr.rel (0) target = $region9
    $region8: #{tpu_custom_call.1} parent=1 // pred_region
      %s20 = ssub.s32 512, 512
      %21 = vsyncadd [#allocation3], %s20
      %s22 = sshll.u32 [#allocation2], 4
      %s23 = int_to_ptr.vmem [resolvable:$true] %s22
      %28 = dma.hbm_to_vmem [thread:$0]  %s1, 512, %s23, [#allocation3], 128, 128, 8
    $region9: #{tpu_custom_call.1} parent=1 // pred_fallthru
      _
    // Predicated region
    $region10: #{tpu_custom_call.1} parent=1 // pred_check
      _
    $region11: #{tpu_custom_call.1} parent=1 // pred_check_branch
      %30 = sbr.rel (0) target = $region13
    $region12: #{tpu_custom_call.1} parent=1 // pred_region
      _
    $region13: #{tpu_custom_call.1} parent=1 // pred_fallthru
      _
    // Predicated region
    $region14: #{tpu_custom_call.1} parent=1 // pred_check
      _
    $region15: #{tpu_custom_call.1} parent=1 // pred_check_branch
      %32 = sbr.rel (0) target = $region17
    $region16: #{tpu_custom_call.1} parent=1 // pred_region
      %s34 = ssub.s32 512, 512
      %35 = vsyncadd [#allocation6], %s34
      %s36 = sshll.u32 [#allocation5], 4
      %s37 = int_to_ptr.vmem [resolvable:$true] %s36
      %42 = dma.hbm_to_vmem [thread:$0]  %s3, 512, %s37, [#allocation6], 128, 128, 8
    $region17: #{tpu_custom_call.1} parent=1 // pred_fallthru
      _
    // Predicated region
    $region18: #{tpu_custom_call.1} parent=1 // pred_check
      _
    $region19: #{tpu_custom_call.1} parent=1 // pred_check_branch
      %44 = sbr.rel (0) target = $region21
    $region20: #{tpu_custom_call.1} parent=1 // pred_region
      _
    $region21: #{tpu_custom_call.1} parent=1 // pred_fallthru
      _
    // Predicated region
    $region22: #{tpu_custom_call.1} parent=1 // pred_check
      _
    $region23: #{tpu_custom_call.1} parent=1 // pred_check_branch
      %46 = sbr.rel (0) target = $region25
    $region24: #{tpu_custom_call.1} parent=1 // pred_region
      _
    $region25: #{tpu_custom_call.1} parent=1 // pred_fallthru
      _
    // Predicated region
    $region26: #{tpu_custom_call.1} parent=1 // pred_check
      _
    $region27: #{tpu_custom_call.1} parent=1 // pred_check_branch
      %48 = sbr.rel (0) target = $region29
    $region28: #{tpu_custom_call.1} parent=1 // pred_region
      _
    $region29: #{tpu_custom_call.1} parent=1 // pred_fallthru
      _
    // Predicated region
    $region30: #{tpu_custom_call.1} parent=1 // pred_check
      _
    $region31: #{tpu_custom_call.1} parent=1 // pred_check_branch
      %50 = sbr.rel (0) target = $region33
    $region32: #{tpu_custom_call.1} parent=1 // pred_region
      %51 = dma.done [#allocation3], 512
    $region33: #{tpu_custom_call.1} parent=1 // pred_fallthru
      _
    // Predicated region
    $region34: #{tpu_custom_call.1} parent=1 // pred_check
      _
    $region35: #{tpu_custom_call.1} parent=1 // pred_check_branch
      %53 = sbr.rel (0) target = $region37
    $region36: #{tpu_custom_call.1} parent=1 // pred_region
      %54 = dma.done [#allocation6], 512
    $region37: #{tpu_custom_call.1} parent=1 // pred_fallthru
      _
    %v55 = vld [vmem:[%s0] sm:$0xf]
    %v56 = vld [vmem:[%s0 + $0x4] sm:$0xf]
    %v57 = vld [vmem:[%s0 + $0x8] sm:$0xf]
    %v58 = vld [vmem:[%s0 + $0xc] sm:$0xf]
    %v59 = vld [vmem:[%s0 + $0x10] sm:$0xf]
    %v60 = vld [vmem:[%s0 + $0x14] sm:$0xf]
    %v61 = vld [vmem:[%s0 + $0x18] sm:$0xf]
    %v62 = vld [vmem:[%s0 + $0x1c] sm:$0xf]
    %v63 = vld [vmem:[#allocation2] sm:$0xff]
    %v64 = vld [vmem:[#allocation2 + $0x8] sm:$0xff]
    %v65 = vld [vmem:[#allocation2 + $0x10] sm:$0xff]
    %v66 = vld [vmem:[#allocation2 + $0x18] sm:$0xff]
    %v67 = vld [vmem:[%s2] sm:$0x1]
    %v69 = vlaneseq
    %v70 = vshrl.u32 %v69, 7
    %v71 = vsub.s32 0, %v70
    %v72 = vrot.slane %v67, %v71
    %v82 = vrot.slane %v56, 7
    %vm83 = vcmask 1041409
    %v84 = vsel %vm83, %v82, %v55
    %v85 = vrot.slane %v57, 6
    %vm86 = vcmask 1042434
    %v87 = vsel %vm86, %v85, %v84
    %v88 = vrot.slane %v58, 5
    %vm89 = vcmask 1043459
    %v90 = vsel %vm89, %v88, %v87
    %v91 = vrot.slane %v59, 4
    %vm92 = vcmask 1044484
    %v93 = vsel %vm92, %v91, %v90
    %v94 = vrot.slane %v60, 3
    %vm95 = vcmask 1045509
    %v96 = vsel %vm95, %v94, %v93
    %v97 = vrot.slane %v61, 2
    %vm98 = vcmask 1046534
    %v99 = vsel %vm98, %v97, %v96
    %v100 = vrot.slane %v62, 1
    %vm101 = vcmask 1047559
    %v102 = vsel %vm101, %v100, %v99
    %vm103 = vcmask 261120
    %v104 = vsel %vm103, %v102, 0
    %106 = vmatprep.subr.mxu0 0.0
    %107 = vmatpush1.msra.mxu0 %v63
    %108 = vmatprep.subr.mxu0 0.0
    %109 = vmatpush1.msra.mxu0 %v64
    %110 = vmatprep.subr.mxu0 0.0
    %111 = vmatpush1.msra.mxu0 %v65
    %112 = vmatprep.subr.mxu0 0.0
    %113 = vmatpush1.msra.mxu0 %v66
    %114 = vmatprep.subr.mxu0 0.0
    %115 = vmatpush1.msra.mxu0 0.0
    %116 = vmatprep.subr.mxu0 0.0
    %117 = vmatpush1.msra.mxu0 0.0
    %118 = vmatprep.subr.mxu0 0.0
    %119 = vmatpush1.msra.mxu0 0.0
    %120 = vmatprep.subr.mxu0 0.0
    %121 = vmatpush1.msra.mxu0 0.0
    %122 = vmatprep.subr.mxu0 0.0
    %123 = vmatpush1.msra.mxu0 0.0
    %124 = vmatprep.subr.mxu0 0.0
    %125 = vmatpush1.msra.mxu0 0.0
    %126 = vmatprep.subr.mxu0 0.0
    %127 = vmatpush1.msra.mxu0 0.0
    %128 = vmatprep.subr.mxu0 0.0
    %129 = vmatpush1.msra.mxu0 0.0
    %130 = vmatprep.subr.mxu0 0.0
    %131 = vmatpush1.msra.mxu0 0.0
    %132 = vmatprep.subr.mxu0 0.0
    %133 = vmatpush1.msra.mxu0 0.0
    %134 = vmatprep.subr.mxu0 0.0
    %135 = vmatpush1.msra.mxu0 0.0
    %136 = vmatprep.subr.mxu0 0.0
    %137 = vmatpush1.msra.mxu0 0.0
    %138 = vmatprep.subr.mxu0 0.0
    %139 = vmatpush1.msra.mxu0 0.0
    %140 = vmatprep.subr.mxu0 0.0
    %141 = vmatpush1.msra.mxu0 0.0
    %142 = vmatprep.subr.mxu0 0.0
    %143 = vmatpush1.msra.mxu0 0.0
    %144 = vmatprep.subr.mxu0 0.0
    %145 = vmatpush1.msra.mxu0 0.0
    %146 = vmatprep.subr.mxu0 0.0
    %147 = vmatpush1.msra.mxu0 0.0
    %148 = vmatprep.subr.mxu0 0.0
    %149 = vmatpush1.msra.mxu0 0.0
    %150 = vmatprep.subr.mxu0 0.0
    %151 = vmatpush1.msra.mxu0 0.0
    %152 = vmatprep.subr.mxu0 0.0
    %153 = vmatpush1.msra.mxu0 0.0
    %154 = vmatprep.subr.mxu0 0.0
    %155 = vmatpush1.msra.mxu0 0.0
    %156 = vmatprep.subr.mxu0 0.0
    %157 = vmatpush1.msra.mxu0 0.0
    %158 = vmatprep.subr.mxu0 0.0
    %159 = vmatpush1.msra.mxu0 0.0
    %160 = vmatprep.subr.mxu0 0.0
    %161 = vmatpush1.msra.mxu0 0.0
    %162 = vmatprep.subr.mxu0 0.0
    %163 = vmatpush1.msra.mxu0 0.0
    %164 = vmatprep.subr.mxu0 0.0
    %165 = vmatpush1.msra.mxu0 0.0
    %166 = vmatprep.subr.mxu0 0.0
    %167 = vmatpush1.msra.mxu0 0.0
    %168 = vmatprep.subr.mxu0 0.0
    %169 = vmatpush1.msra.mxu0 0.0
    %170 = vmatprep.mubr.f32.mxu0 0.0
    %171 = vmatmul.mubr.f32.gmra.mrb[0].mxu0 %v104
    %v172 = vpop.f32.mrb[0].mxu0
    %v173 = vadd.f32 %v72, %v172
    %v174 = vpop.f32.mrb[0].mxu0
    %175 = vdwg.mxu0
    %vm176 = vcmp.gt.f32.partialorder %v173, 0.0
    %v177 = vmul.f32 %v173, 0.01
    %v178 = vsel %vm176, %v173, %v177
    %v179 = vld [vmem:[#allocation5] sm:$0xff]
    %v180 = vld [vmem:[#allocation5 + $0x8] sm:$0xff]
    %v181 = vld [vmem:[#allocation5 + $0x10] sm:$0xff]
    %v182 = vld [vmem:[#allocation5 + $0x18] sm:$0xff]
    %v183 = vld [vmem:[%s4] sm:$0x1]
    %v185 = vlaneseq
    %v186 = vshrl.u32 %v185, 7
    %v187 = vsub.s32 0, %v186
    %v188 = vrot.slane %v183, %v187
    %v191 = vsel %vm103, %v178, 0
    %193 = vmatprep.subr.mxu0 0.0
    %194 = vmatpush1.msra.mxu0 %v179
    %195 = vmatprep.subr.mxu0 0.0
    %196 = vmatpush1.msra.mxu0 %v180
    %197 = vmatprep.subr.mxu0 0.0
    %198 = vmatpush1.msra.mxu0 %v181
    %199 = vmatprep.subr.mxu0 0.0
    %200 = vmatpush1.msra.mxu0 %v182
    %201 = vmatprep.subr.mxu0 0.0
    %202 = vmatpush1.msra.mxu0 0.0
    %203 = vmatprep.subr.mxu0 0.0
    %204 = vmatpush1.msra.mxu0 0.0
    %205 = vmatprep.subr.mxu0 0.0
    %206 = vmatpush1.msra.mxu0 0.0
    %207 = vmatprep.subr.mxu0 0.0
    %208 = vmatpush1.msra.mxu0 0.0
    %209 = vmatprep.subr.mxu0 0.0
    %210 = vmatpush1.msra.mxu0 0.0
    %211 = vmatprep.subr.mxu0 0.0
    %212 = vmatpush1.msra.mxu0 0.0
    %213 = vmatprep.subr.mxu0 0.0
    %214 = vmatpush1.msra.mxu0 0.0
    %215 = vmatprep.subr.mxu0 0.0
    %216 = vmatpush1.msra.mxu0 0.0
    %217 = vmatprep.subr.mxu0 0.0
    %218 = vmatpush1.msra.mxu0 0.0
    %219 = vmatprep.subr.mxu0 0.0
    %220 = vmatpush1.msra.mxu0 0.0
    %221 = vmatprep.subr.mxu0 0.0
    %222 = vmatpush1.msra.mxu0 0.0
    %223 = vmatprep.subr.mxu0 0.0
    %224 = vmatpush1.msra.mxu0 0.0
    %225 = vmatprep.subr.mxu0 0.0
    %226 = vmatpush1.msra.mxu0 0.0
    %227 = vmatprep.subr.mxu0 0.0
    %228 = vmatpush1.msra.mxu0 0.0
    %229 = vmatprep.subr.mxu0 0.0
    %230 = vmatpush1.msra.mxu0 0.0
    %231 = vmatprep.subr.mxu0 0.0
    %232 = vmatpush1.msra.mxu0 0.0
    %233 = vmatprep.subr.mxu0 0.0
    %234 = vmatpush1.msra.mxu0 0.0
    %235 = vmatprep.subr.mxu0 0.0
    %236 = vmatpush1.msra.mxu0 0.0
    %237 = vmatprep.subr.mxu0 0.0
    %238 = vmatpush1.msra.mxu0 0.0
    %239 = vmatprep.subr.mxu0 0.0
    %240 = vmatpush1.msra.mxu0 0.0
    %241 = vmatprep.subr.mxu0 0.0
    %242 = vmatpush1.msra.mxu0 0.0
    %243 = vmatprep.subr.mxu0 0.0
    %244 = vmatpush1.msra.mxu0 0.0
    %245 = vmatprep.subr.mxu0 0.0
    %246 = vmatpush1.msra.mxu0 0.0
    %247 = vmatprep.subr.mxu0 0.0
    %248 = vmatpush1.msra.mxu0 0.0
    %249 = vmatprep.subr.mxu0 0.0
    %250 = vmatpush1.msra.mxu0 0.0
    %251 = vmatprep.subr.mxu0 0.0
    %252 = vmatpush1.msra.mxu0 0.0
    %253 = vmatprep.subr.mxu0 0.0
    %254 = vmatpush1.msra.mxu0 0.0
    %255 = vmatprep.subr.mxu0 0.0
    %256 = vmatpush1.msra.mxu0 0.0
    %257 = vmatprep.mubr.f32.mxu0 0.0
    %258 = vmatmul.mubr.f32.gmra.mrb[0].mxu0 %v191
    %v259 = vpop.f32.mrb[0].mxu0
    %v260 = vadd.f32 %v188, %v259
    %v261 = vpop.f32.mrb[0].mxu0
    %262 = vdwg.mxu0
    %vm263 = vcmp.gt.f32.partialorder %v260, 0.0
    %v264 = vmul.f32 %v260, 0.01
    %v265 = vsel %vm263, %v260, %v264
    %v266 = vld [vmem:[%s5] sm:$0xff]
    %v267 = vld [vmem:[%s5 + $0x8] sm:$0xff]
    %v268 = vld [vmem:[%s5 + $0x10] sm:$0xff]
    %v269 = vld [vmem:[%s5 + $0x18] sm:$0xff]
    %v270 = vld [vmem:[%s6] sm:$0x1]
    %v272 = vlaneseq
    %v273 = vshrl.u32 %v272, 7
    %v274 = vsub.s32 0, %v273
    %v275 = vrot.slane %v270, %v274
    %v278 = vsel %vm103, %v265, 0
    %280 = vmatprep.subr.mxu0 0.0
    %281 = vmatpush1.msra.mxu0 %v266
    %282 = vmatprep.subr.mxu0 0.0
    %283 = vmatpush1.msra.mxu0 %v267
    %284 = vmatprep.subr.mxu0 0.0
    %285 = vmatpush1.msra.mxu0 %v268
    %286 = vmatprep.subr.mxu0 0.0
    %287 = vmatpush1.msra.mxu0 %v269
    %288 = vmatprep.subr.mxu0 0.0
    %289 = vmatpush1.msra.mxu0 0.0
    %290 = vmatprep.subr.mxu0 0.0
    %291 = vmatpush1.msra.mxu0 0.0
    %292 = vmatprep.subr.mxu0 0.0
    %293 = vmatpush1.msra.mxu0 0.0
    %294 = vmatprep.subr.mxu0 0.0
    %295 = vmatpush1.msra.mxu0 0.0
    %296 = vmatprep.subr.mxu0 0.0
    %297 = vmatpush1.msra.mxu0 0.0
    %298 = vmatprep.subr.mxu0 0.0
    %299 = vmatpush1.msra.mxu0 0.0
    %300 = vmatprep.subr.mxu0 0.0
    %301 = vmatpush1.msra.mxu0 0.0
    %302 = vmatprep.subr.mxu0 0.0
    %303 = vmatpush1.msra.mxu0 0.0
    %304 = vmatprep.subr.mxu0 0.0
    %305 = vmatpush1.msra.mxu0 0.0
    %306 = vmatprep.subr.mxu0 0.0
    %307 = vmatpush1.msra.mxu0 0.0
    %308 = vmatprep.subr.mxu0 0.0
    %309 = vmatpush1.msra.mxu0 0.0
    %310 = vmatprep.subr.mxu0 0.0
    %311 = vmatpush1.msra.mxu0 0.0
    %312 = vmatprep.subr.mxu0 0.0
    %313 = vmatpush1.msra.mxu0 0.0
    %314 = vmatprep.subr.mxu0 0.0
    %315 = vmatpush1.msra.mxu0 0.0
    %316 = vmatprep.subr.mxu0 0.0
    %317 = vmatpush1.msra.mxu0 0.0
    %318 = vmatprep.subr.mxu0 0.0
    %319 = vmatpush1.msra.mxu0 0.0
    %320 = vmatprep.subr.mxu0 0.0
    %321 = vmatpush1.msra.mxu0 0.0
    %322 = vmatprep.subr.mxu0 0.0
    %323 = vmatpush1.msra.mxu0 0.0
    %324 = vmatprep.subr.mxu0 0.0
    %325 = vmatpush1.msra.mxu0 0.0
    %326 = vmatprep.subr.mxu0 0.0
    %327 = vmatpush1.msra.mxu0 0.0
    %328 = vmatprep.subr.mxu0 0.0
    %329 = vmatpush1.msra.mxu0 0.0
    %330 = vmatprep.subr.mxu0 0.0
    %331 = vmatpush1.msra.mxu0 0.0
    %332 = vmatprep.subr.mxu0 0.0
    %333 = vmatpush1.msra.mxu0 0.0
    %334 = vmatprep.subr.mxu0 0.0
    %335 = vmatpush1.msra.mxu0 0.0
    %336 = vmatprep.subr.mxu0 0.0
    %337 = vmatpush1.msra.mxu0 0.0
    %338 = vmatprep.subr.mxu0 0.0
    %339 = vmatpush1.msra.mxu0 0.0
    %340 = vmatprep.subr.mxu0 0.0
    %341 = vmatpush1.msra.mxu0 0.0
    %342 = vmatprep.subr.mxu0 0.0
    %343 = vmatpush1.msra.mxu0 0.0
    %344 = vmatprep.mubr.f32.mxu0 0.0
    %345 = vmatmul.mubr.f32.gmra.mrb[0].mxu0 %v278
    %v346 = vpop.f32.mrb[0].mxu0
    %v347 = vadd.f32 %v275, %v346
    %v348 = vpop.f32.mrb[0].mxu0
    %349 = vdwg.mxu0
    %vm350 = vcmask 64512
    %351 = vst.msk [vmem:[#allocation7] sm:$0xff] %vm350, %v347
    // Predicated region
    $region38: #{tpu_custom_call.1} parent=1 // pred_check
      _
    $region39: #{tpu_custom_call.1} parent=1 // pred_check_branch
      %353 = sbr.rel (0) target = $region41
    $region40: #{tpu_custom_call.1} parent=1 // pred_region
      %s355 = ssub.s32 128, 128
      %356 = vsyncadd [#allocation4], %s355
      %s358 = sshll.u32 [#allocation7], 4
      %s359 = int_to_ptr.vmem [resolvable:$true] %s358
      %361 = dma.vmem_to_hbm [thread:$0]  %s359, 128, %s7, [#allocation4]
    $region41: #{tpu_custom_call.1} parent=1 // pred_fallthru
      _
    // Predicated region
    $region42: #{tpu_custom_call.1} parent=1 // pred_check
      _
    $region43: #{tpu_custom_call.1} parent=1 // pred_check_branch
      %363 = sbr.rel (0) target = $region45
    $region44: #{tpu_custom_call.1} parent=1 // pred_region
      %364 = dma.done [#allocation4], 128
    $region45: #{tpu_custom_call.1} parent=1 // pred_fallthru
      _
    %365 = vsyncpa [#allocation3], 1
    %366 = vsyncpa [#allocation6], 1
    %367 = vsyncpa [#allocation4], 1

</llo_original>
